<compile_context>
chip_gen: v7x
topology: tpu7x:2x2x1
jax: 0.10.0
libtpu: 0.0.40
codegen_flags: <defaults>
</compile_context>

<pallas_src>
import jax
import jax.numpy as jnp
from jax.experimental import pallas as pl
from jax.experimental.pallas import tpu as pltpu


def classic_attention_kernel(x_ref, wv_ref, bv_ref, o_ref):
    # x_ref : (Bt, T, Din)  slab of batch elements
    # wv_ref: (1, Din)      collapsed weight  W^T @ v
    # bv_ref: (1, 1)        collapsed bias    b . v
    # o_ref : (Bt, T)       normalized attention weights
    x = x_ref[...].astype(jnp.float32)                  # (Bt, T, Din)
    wv = wv_ref[...].astype(jnp.float32)                # (1, Din)

    # scores = x . wv + bv   (VPU multiply + lane reduce; MXU intentionally idle)
    s = jnp.sum(x * wv[:, None, :], axis=-1)            # (Bt, T)
    s = jnp.tanh(s + bv_ref[...])                       # (1,1) broadcasts to (Bt, T)

    # numerically stable softmax over the sequence axis T
    m = jnp.max(s, axis=-1, keepdims=True)
    e = jnp.exp(s - m)
    denom = jnp.sum(e, axis=-1, keepdims=True)
    o_ref[...] = (e * pl.reciprocal(denom, approx=True)).astype(o_ref.dtype)


def classic_attention(x, w, b, v, *, block_b=None):
    """x: (B, T, Din); w: (E, Din); b: (E,); v: (E,). Returns (B, T) float32."""
    B, T, Din = x.shape

    # Exact collapse of the linear layer + dot with v (one tiny XLA matvec):
    #   (x @ W^T + b) @ v == x @ (W^T v) + (b . v)
    wv = jnp.matmul(v.astype(jnp.float32), w.astype(jnp.float32)).reshape(1, Din)
    bv = jnp.dot(b.astype(jnp.float32), v.astype(jnp.float32)).reshape(1, 1)

    # Batch block sizing: ~2 MiB of x per block (double-buffered by the
    # pipeline), comfortably inside the scoped-VMEM defaults on v5e/v6e/v7x.
    if block_b is None:
        bytes_per_row = T * Din * x.dtype.itemsize
        block_b = max(1, (2 << 20) // max(1, bytes_per_row))
    if block_b >= B:
        block_b = B                              # single step, full-extent blocks
    else:
        block_b = max(8, (block_b // 8) * 8)     # sublane-aligned multi-step blocks

    nb = pl.cdiv(B, block_b)
    Bp = nb * block_b
    x_p = x if Bp == B else jnp.pad(x, ((0, Bp - B), (0, 0), (0, 0)))
    # TODO(synk): for very large mem-bound batches, feeding x as bf16 would halve
    # HBM traffic (accumulation stays f32 in-kernel); kept f32 to match numerics.

    out = pl.pallas_call(
        classic_attention_kernel,
        out_shape=jax.ShapeDtypeStruct((Bp, T), jnp.float32),
        grid_spec=pltpu.PrefetchScalarGridSpec(
            num_scalar_prefetch=0,
            grid=(nb,),
            in_specs=[
                pl.BlockSpec((block_b, T, Din), lambda i: (i, 0, 0)),  # x slab
                pl.BlockSpec((1, Din), lambda i: (0, 0)),              # wv (resident)
                pl.BlockSpec((1, 1), lambda i: (0, 0)),                # bv (resident)
            ],
            out_specs=pl.BlockSpec((block_b, T), lambda i: (i, 0)),
        ),
        compiler_params=pltpu.CompilerParams(
            dimension_semantics=("parallel",)),
    )(x_p, wv, bv)
    return out[:B]


def _reference(x, w, b, v):
    lin = jnp.einsum("btd,ed->bte", x, w) + b            # (B, T, E)
    scores = jnp.tanh(jnp.einsum("bte,e->bt", lin, v))   # (B, T)
    return jax.nn.softmax(scores, axis=1)                # softmax over T


if __name__ == "__main__":
    # Small, module-consistent shapes: batch=2, seq=8, input_dim=32, embed_dim=32
    B, T, Din, E = 2, 8, 32, 32
    key = jax.random.PRNGKey(0)
    kx, kw, kb, kv = jax.random.split(key, 4)

    x = jax.random.normal(kx, (B, T, Din), dtype=jnp.float32)
    # Deterministic synthetic parameters (not a checkpoint load)
    w = jax.random.normal(kw, (E, Din), dtype=jnp.float32) * (1.0 / jnp.sqrt(Din))
    b = jax.random.normal(kb, (E,), dtype=jnp.float32) * 0.01
    v = jax.random.normal(kv, (E,), dtype=jnp.float32)
    # TODO(synk): attn_dropout=0.0 is never applied in the reference forward, so it is omitted.

    out = jax.block_until_ready(classic_attention(x, w, b, v))
    ref = _reference(x, w, b, v)

    assert out.shape == (B, T)
    # tolerance accounts for the EUP approx-reciprocal in the softmax epilogue
    assert jnp.allclose(out, ref, atol=2e-3, rtol=2e-3), "mismatch vs JAX reference"

    print("KERNEL_OK")
</pallas_src>

<mosaic_0001>
module attributes {stable_mosaic.version = 11 : i64} {
  func.func @classic_attention_kernel(%arg0: i32, %arg1: memref<2x8x32xf32, #tpu.memory_space<vmem>>, %arg2: memref<1x32xf32, #tpu.memory_space<vmem>>, %arg3: memref<1x1xf32, #tpu.memory_space<vmem>>, %arg4: memref<2x8xf32, #tpu.memory_space<vmem>>) attributes {dimension_semantics = [#tpu.dimension_semantics<parallel>], iteration_bounds = array<i64: 1>, scalar_prefetch = 0 : i64, scratch_operands = 0 : i64, tpu.core_type = #tpu.core_type<tc>, window_params = [{transform_indices = @transform_0, window_bounds = array<i64: 2, 8, 32>}, {pipeline_mode = #tpu.pipeline_mode<synchronous>, transform_indices = @transform_1, window_bounds = array<i64: 1, 32>}, {pipeline_mode = #tpu.pipeline_mode<synchronous>, transform_indices = @transform_2, window_bounds = array<i64: 1, 1>}, {transform_indices = @transform_3, window_bounds = array<i64: 2, 8>}]} {
    %c0 = arith.constant 0 : index
    %c0_0 = arith.constant 0 : index
    %c0_1 = arith.constant 0 : index
    %0 = vector.load %arg1[%c0, %c0_0, %c0_1] : memref<2x8x32xf32, #tpu.memory_space<vmem>>, vector<2x8x32xf32>
    %c0_2 = arith.constant 0 : index
    %c0_3 = arith.constant 0 : index
    %1 = vector.load %arg2[%c0_2, %c0_3] : memref<1x32xf32, #tpu.memory_space<vmem>>, vector<1x32xf32>
    %2 = vector.shape_cast %1 : vector<1x32xf32> to vector<1x1x32xf32>
    %3 = vector.broadcast %2 : vector<1x1x32xf32> to vector<2x8x32xf32>
    %4 = arith.mulf %0, %3 : vector<2x8x32xf32>
    %cst = arith.constant dense<0.000000e+00> : vector<2x8xf32>
    %5 = vector.multi_reduction <add>, %4, %cst [2] : vector<2x8x32xf32> to vector<2x8xf32>
    %c0_4 = arith.constant 0 : index
    %c0_5 = arith.constant 0 : index
    %6 = vector.load %arg3[%c0_4, %c0_5] : memref<1x1xf32, #tpu.memory_space<vmem>>, vector<1x1xf32>
    %7 = vector.broadcast %6 : vector<1x1xf32> to vector<2x8xf32>
    %8 = arith.addf %5, %7 : vector<2x8xf32>
    %9 = math.tanh %8 : vector<2x8xf32>
    %cst_6 = arith.constant dense<0xFF800000> : vector<2xf32>
    %10 = vector.multi_reduction <maximumf>, %9, %cst_6 [1] : vector<2x8xf32> to vector<2xf32>
    %11 = vector.shape_cast %10 : vector<2xf32> to vector<2x1xf32>
    %12 = vector.broadcast %11 : vector<2x1xf32> to vector<2x8xf32>
    %13 = arith.subf %9, %12 : vector<2x8xf32>
    %14 = math.exp %13 : vector<2x8xf32>
    %cst_7 = arith.constant dense<0.000000e+00> : vector<2xf32>
    %15 = vector.multi_reduction <add>, %14, %cst_7 [1] : vector<2x8xf32> to vector<2xf32>
    %16 = vector.shape_cast %15 : vector<2xf32> to vector<2x1xf32>
    %17 = tpu.reciprocal %16 {approx = true} : vector<2x1xf32> -> vector<2x1xf32>
    %18 = vector.broadcast %17 : vector<2x1xf32> to vector<2x8xf32>
    %19 = arith.mulf %14, %18 : vector<2x8xf32>
    %c0_8 = arith.constant 0 : index
    %c0_9 = arith.constant 0 : index
    %20 = vector.load %arg4[%c0_8, %c0_9] : memref<2x8xf32, #tpu.memory_space<vmem>>, vector<2x8xf32>
    tpu.vector_store %arg4[%c0_8, %c0_9], %19 {strides = array<i32>} : memref<2x8xf32, #tpu.memory_space<vmem>>, vector<2x8xf32>,
    return
  }
  func.func @transform_0(%arg0: i32) -> (i32, i32, i32) {
    %c0_i32 = arith.constant 0 : i32
    %c0_i32_0 = arith.constant 0 : i32
    %c0_i32_1 = arith.constant 0 : i32
    return %arg0, %c0_i32, %c0_i32_0 : i32, i32, i32
  }
  func.func @transform_1(%arg0: i32) -> (i32, i32) {
    %c0_i32 = arith.constant 0 : i32
    %c0_i32_0 = arith.constant 0 : i32
    %c0_i32_1 = arith.constant 0 : i32
    return %c0_i32, %c0_i32_0 : i32, i32
  }
  func.func @transform_2(%arg0: i32) -> (i32, i32) {
    %c0_i32 = arith.constant 0 : i32
    %c0_i32_0 = arith.constant 0 : i32
    %c0_i32_1 = arith.constant 0 : i32
    return %c0_i32, %c0_i32_0 : i32, i32
  }
  func.func @transform_3(%arg0: i32) -> (i32, i32) {
    %c0_i32 = arith.constant 0 : i32
    %c0_i32_0 = arith.constant 0 : i32
    return %arg0, %c0_i32 : i32, i32
  }
}

</mosaic_0001>

<llo_original>
// kernel: tpu_custom_call.1
$region0: #{tpu_custom_call.1}
  #allocation0 [shape = 'u32[]', space=smem, size = 0x4, offset = 0x4, fixed_abs, tag = 'smem constant byte address 0x4 - core index']
  #allocation1 [shape = 'u32[144,128]{1,0:T(1,128)}', space=vmem, size = 0x12000, scoped, tag = 'internal scratch']
  #allocation2 [shape = 'f32[1,1]{1,0:T(1,128)S(1)}', space=vmem, size = 0x200, scoped, tag = 'scoped memory for tpu_custom_call.1']
  %s0 = inlined_call_operand.hbm [shape: f32[2,8,32], index: 0, kind: input, shape index: {}]
  %s1 = inlined_call_operand.vmem [shape: f32[1,32], index: 1, kind: input, shape index: {}]
  %s2 = inlined_call_operand.<no memory space> [shape: f32[1,1], index: 2, kind: input, shape index: {}]
  %s3 = inlined_call_operand.hbm [shape: f32[2,8], index: 3, kind: output, shape index: {}]
  %s4 = sld [smem:[#allocation0]]
  $region26: #{tpu_custom_call.1} parent=0
    _
  %s6 = ssub.s32 1, %s4
  %s7 = scalar_select 0, %s6, %s4
  %v8 = vstv %s2
  %9 = vst [vmem:[#allocation2] sm:$0x1] %v8
  $region1: #{tpu_custom_call.1} parent=0
    #allocation3 [shape = 'u8[8192]{0}', space=vmem, size = 0x2000, scoped, tag = 'input window, operand 0, single buffered']
    #allocation4 [shape = 's32[1]{0}', space=sflag, size = 0x4, scoped, tag = 'scoped memory for tpu_custom_call.1']
    #allocation5 [shape = 's32[1]{0}', space=sflag, size = 0x4, scoped, tag = 'scoped memory for tpu_custom_call.1']
    #allocation6 [shape = 'u8[1024]{0}', space=vmem, size = 0x400, scoped, tag = 'output window, operand 0, single buffered']
    %10 = vsyncpa [#allocation4], 0
    %11 = vsyncpa [#allocation5], 0
    // Predicated region
    $region2: #{tpu_custom_call.1} parent=1 // pred_check
      _
    $region3: #{tpu_custom_call.1} parent=1 // pred_check_branch
      %13 = sbr.rel (0) target = $region5
    $region4: #{tpu_custom_call.1} parent=1 // pred_region
      %s15 = ssub.s32 256, 256
      %16 = vsyncadd [#allocation4], %s15
      %s17 = sshll.u32 [#allocation3], 4
      %s18 = int_to_ptr.vmem [resolvable:$true] %s17
      %23 = dma.hbm_to_vmem [thread:$0]  %s0, 256, %s18, [#allocation4], 128, 128, 8
    $region5: #{tpu_custom_call.1} parent=1 // pred_fallthru
      _
    // Predicated region
    $region6: #{tpu_custom_call.1} parent=1 // pred_check
      _
    $region7: #{tpu_custom_call.1} parent=1 // pred_check_branch
      %25 = sbr.rel (0) target = $region9
    $region8: #{tpu_custom_call.1} parent=1 // pred_region
      _
    $region9: #{tpu_custom_call.1} parent=1 // pred_fallthru
      _
    // Predicated region
    $region10: #{tpu_custom_call.1} parent=1 // pred_check
      _
    $region11: #{tpu_custom_call.1} parent=1 // pred_check_branch
      %27 = sbr.rel (0) target = $region13
    $region12: #{tpu_custom_call.1} parent=1 // pred_region
      _
    $region13: #{tpu_custom_call.1} parent=1 // pred_fallthru
      _
    // Predicated region
    $region14: #{tpu_custom_call.1} parent=1 // pred_check
      _
    $region15: #{tpu_custom_call.1} parent=1 // pred_check_branch
      %29 = sbr.rel (0) target = $region17
    $region16: #{tpu_custom_call.1} parent=1 // pred_region
      %30 = dma.done [#allocation4], 256
    $region17: #{tpu_custom_call.1} parent=1 // pred_fallthru
      _
    %v31 = vld [vmem:[#allocation3] sm:$0xff]
    %v32 = vld [vmem:[#allocation3 + $0x8] sm:$0xff]
    %v33 = vld [vmem:[%s1] sm:$0x1]
    %v35 = vlaneseq
    %v36 = vshrl.u32 %v35, 7
    %v37 = vsub.s32 0, %v36
    %v38 = vrot.slane %v33, %v37
    %v40 = vmul.f32 %v31, %v38
    %v41 = vmul.f32 %v32, %v38
    %vm42 = vcmask 261120
    %v43 = vsel %vm42, %v40, 0.0
    %44 = vadd.xlane.f32.xlu0 %v43
    %v45 = vpop.xlane.xlu0 %44
    %v46 = vsel %vm42, %v41, 0.0
    %47 = vadd.xlane.f32.xlu0 %v46
    %v48 = vpop.xlane.xlu0 %47
    %v49 = vld [vmem:[#allocation2] sm:$0x1]
    %v51 = vlaneseq
    %v52 = vshrl.u32 %v51, 7
    %v53 = vsub.s32 0, %v52
    %v54 = vrot.slane %v49, %v53
    %55 = vset.pattern.permute.xlu0 0
    %56 = vperm.xlu0 %55, %v54
    %v57 = vpop.permute.xlu0 %56
    %v59 = vadd.f32 %v45, %v57
    %v60 = vadd.f32 %v48, %v57
    %v61 = vtanh.pop %v59
    %v62 = vtanh.pop %v60
    %v65 = vlaneseq
    %v66 = vand.u32 %v65, 127
    %v67 = vlaneseq
    %v68 = vshrl.u32 %v67, 7
    %v69 = vsub.s32 %v66, %v68
    %v70 = vrot.slane %v61, %v69
    %v71 = vlaneseq
    %v72 = vshrl.u32 %v71, 7
    %v73 = vsub.s32 %v66, %v72
    %v74 = vrot.slane %v62, %v73
    %vm75 = vcmask 1041409
    %v76 = vsel %vm75, %v74, %v70
    %vm78 = vcmask 58368
    %v79 = vsel %vm78, %v76, -inf
    %80 = vmax.xlane.f32.xlu0 %v79
    %v81 = vpop.xlane.xlu0 %80
    %v83 = vlaneseq
    %v84 = vshrl.u32 %v83, 7
    %v85 = vsub.s32 0, %v84
    %v86 = vrot.slane %v81, %v85
    %v87 = vlaneseq
    %v88 = vshrl.u32 %v87, 7
    %v89 = vsub.s32 1, %v88
    %v90 = vrot.slane %v81, %v89
    %v93 = vsub.f32 %v61, %v86
    %v94 = vsub.f32 %v62, %v90
    %v95 = vmul.f32 %v93, 1.442695
    %v96 = vpow.pop %v95
    %v97 = vmul.f32 %v94, 1.442695
    %v98 = vpow.pop %v97
    %101 = vset.pattern.permute.xlu0 0
    %102 = vperm.xlu0 %101, %v96
    %v103 = vpop.permute.xlu0 %102
    %104 = vset.pattern.permute.xlu0 0
    %105 = vperm.xlu0 %104, %v98
    %v106 = vpop.permute.xlu0 %105
    %v107 = vlaneseq
    %v108 = vshrl.u32 %v107, 7
    %v109 = vsub.s32 %v66, %v108
    %v110 = vrot.slane %v103, %v109
    %v111 = vlaneseq
    %v112 = vshrl.u32 %v111, 7
    %v113 = vsub.s32 %v66, %v112
    %v114 = vrot.slane %v106, %v113
    %v115 = vsel %vm75, %v114, %v110
    %v117 = vsel %vm78, %v115, 0.0
    %118 = vadd.xlane.f32.xlu0 %v117
    %v119 = vpop.xlane.xlu0 %118
    %v120 = vrcp.pop %v119
    %v122 = vlaneseq
    %v123 = vshrl.u32 %v122, 7
    %v124 = vsub.s32 0, %v123
    %v125 = vrot.slane %v120, %v124
    %v126 = vlaneseq
    %v127 = vshrl.u32 %v126, 7
    %v128 = vsub.s32 1, %v127
    %v129 = vrot.slane %v120, %v128
    %v132 = vmul.f32 %v96, %v125
    %v133 = vmul.f32 %v98, %v129
    %136 = vset.pattern.permute.xlu0 0
    %137 = vperm.xlu0 %136, %v132
    %v138 = vpop.permute.xlu0 %137
    %139 = vset.pattern.permute.xlu0 0
    %140 = vperm.xlu0 %139, %v133
    %v141 = vpop.permute.xlu0 %140
    %v142 = vlaneseq
    %v143 = vshrl.u32 %v142, 7
    %v144 = vsub.s32 %v66, %v143
    %v145 = vrot.slane %v138, %v144
    %v146 = vlaneseq
    %v147 = vshrl.u32 %v146, 7
    %v148 = vsub.s32 %v66, %v147
    %v149 = vrot.slane %v141, %v148
    %v150 = vsel %vm75, %v149, %v145
    %152 = vst.msk [vmem:[#allocation6] sm:$0x3] %vm78, %v150
    // Predicated region
    $region18: #{tpu_custom_call.1} parent=1 // pred_check
      _
    $region19: #{tpu_custom_call.1} parent=1 // pred_check_branch
      %154 = sbr.rel (0) target = $region21
    $region20: #{tpu_custom_call.1} parent=1 // pred_region
      %s156 = ssub.s32 32, 32
      %157 = vsyncadd [#allocation5], %s156
      %s159 = sshll.u32 [#allocation6], 4
      %s160 = int_to_ptr.vmem [resolvable:$true] %s159
      %162 = dma.vmem_to_hbm [thread:$0]  %s160, 32, %s3, [#allocation5]
    $region21: #{tpu_custom_call.1} parent=1 // pred_fallthru
      _
    // Predicated region
    $region22: #{tpu_custom_call.1} parent=1 // pred_check
      _
    $region23: #{tpu_custom_call.1} parent=1 // pred_check_branch
      %164 = sbr.rel (0) target = $region25
    $region24: #{tpu_custom_call.1} parent=1 // pred_region
      %165 = dma.done [#allocation5], 32
    $region25: #{tpu_custom_call.1} parent=1 // pred_fallthru
      _
    %166 = vsyncpa [#allocation4], 1
    %167 = vsyncpa [#allocation5], 1

</llo_original>
